<compile_context>
chip_gen: v7x
topology: tpu7x:2x2x1
jax: 0.10.0
libtpu: 0.0.40
codegen_flags: <defaults>
</compile_context>

<pallas_src>
import functools

import jax
import jax.numpy as jnp
from jax.experimental import pallas as pl
from jax.experimental.pallas import tpu as pltpu

_MASKED_LOGIT = -1e30  # finite "-inf": exp() underflows to 0 in the logsumexp


def _round_up(x, m):
    return ((x + m - 1) // m) * m


def _cdiv(a, b):
    return (a + b - 1) // b


def _generator_kernel(x_ref, w_ref, b_ref, o_ref, m_sc, l_sc, lse_sc, *,
                      vocab, tv, mask_vocab):
    """Fused Linear + log_softmax; flash-style two-phase sweep over vocab tiles."""
    p = pl.program_id(1)      # phase: 0 = logsumexp accumulation, 1 = write output
    j = pl.program_id(2)      # vocab tile
    nj = pl.num_programs(2)

    @pl.when(jnp.logical_and(p == 0, j == 0))
    def _():
        m_sc[...] = jnp.full_like(m_sc, -jnp.inf)
        l_sc[...] = jnp.zeros_like(l_sc)

    # Native-dtype MXU matmul, f32 accumulation. Bias already f32 (wrapper cast).
    logits = jnp.dot(x_ref[...], w_ref[...], preferred_element_type=jnp.float32)
    logits = logits + b_ref[...]
    if mask_vocab:
        # Ragged last vocab tile: mask out-of-range columns so they vanish from
        # the logsumexp (avoids materializing a padded copy of the weight).
        col = j * tv + jax.lax.broadcasted_iota(jnp.int32, logits.shape, 1)
        logits = jnp.where(col < vocab, logits, _MASKED_LOGIT)

    @pl.when(p == 0)
    def _():
        m_prev = m_sc[...]
        m_new = jnp.maximum(m_prev, jnp.max(logits, axis=-1, keepdims=True))
        l_sc[...] = (jnp.exp(m_prev - m_new) * l_sc[...]
                     + jnp.sum(jnp.exp(logits - m_new), axis=-1, keepdims=True))
        m_sc[...] = m_new

    @pl.when(jnp.logical_and(p == 0, j == nj - 1))
    def _():
        lse_sc[...] = m_sc[...] + jnp.log(l_sc[...])

    @pl.when(p == 1)
    def _():
        o_ref[...] = (logits - lse_sc[...]).astype(o_ref.dtype)


# (row_tile, vocab_tile) preference: prioritize large row tiles (weight HBM
# traffic ~ 1/row_tile), keep vocab tiles MXU/lane friendly.
_TILE_CANDIDATES = (
    (1024, 2048), (1024, 1024), (768, 1024), (512, 1024), (512, 512),
    (384, 512), (256, 512), (256, 256), (128, 256), (64, 256),
    (32, 128), (16, 128), (8, 128),
)


def _vmem_estimate(tm, tv, d_model, in_itemsize, out_itemsize):
    x_w = 2 * (tm * d_model + d_model * tv) * in_itemsize   # double-buffered x / w
    bias = 2 * tv * 4                                        # f32 bias tile
    out = 2 * tm * tv * out_itemsize                         # double-buffered output
    interm = 2 * tm * tv * 4                                 # f32 logits + exp temps
    scratch = 3 * tm * 4
    return x_w + bias + out + interm + scratch


def generator_forward(x, w, b, *, tile_rows=None, tile_vocab=None,
                      out_dtype=None, matmul_dtype=None):
    """log_softmax(x @ w + b, axis=-1).

    x: (batch, seq, d_model)
    w: (d_model, vocab)  -- PyTorch nn.Linear weight, transposed
    b: (vocab,)
    matmul_dtype: optionally cast x / w (e.g. jnp.bfloat16) once in the wrapper
      to halve the dominant weight HBM stream; accumulation stays f32.
    """
    batch, seq, d_model = x.shape
    dm2, vocab = w.shape
    assert dm2 == d_model
    assert b.shape == (vocab,)
    if out_dtype is None:
        out_dtype = x.dtype

    n = batch * seq
    x2 = x.reshape(n, d_model)
    if matmul_dtype is not None:
        x2 = x2.astype(matmul_dtype)
        w = w.astype(matmul_dtype)
    b2 = b.astype(jnp.float32).reshape(1, vocab)   # pre-cast bias once

    in_itemsize = jnp.dtype(x2.dtype).itemsize
    out_itemsize = jnp.dtype(out_dtype).itemsize

    try:
        vmem_cap = int(pltpu.get_tpu_info().vmem_capacity_bytes)
    except Exception:
        vmem_cap = 64 * 1024 * 1024          # conservative (v7x-sized) fallback
    vmem_budget = int(0.75 * vmem_cap)

    # ---- tile selection (generation-aware) --------------------------------
    auto_tm, auto_tv = 8, 128
    if tile_rows is None or tile_vocab is None:
        for cand_tm, cand_tv in _TILE_CANDIDATES:
            c_tm = min(cand_tm, _round_up(n, 8))
            c_tv = min(cand_tv, _round_up(vocab, 128))
            if _vmem_estimate(c_tm, c_tv, d_model, in_itemsize,
                              out_itemsize) <= vmem_budget:
                auto_tm, auto_tv = c_tm, c_tv
                break
    tm = auto_tm if tile_rows is None else min(_round_up(tile_rows, 8),
                                               _round_up(n, 8))
    tv = auto_tv if tile_vocab is None else min(_round_up(tile_vocab, 128),
                                                _round_up(vocab, 128))

    # Megacore / v7x dual-TC: keep >= 2 steps on the parallel row axis when
    # there is enough work to split.
    if tm >= n and n >= 512:
        tm = _round_up(_cdiv(n, 2), 8)

    # Prefer a vocab tile that divides vocab exactly (skips the in-kernel
    # column mask); otherwise keep tv and mask the ragged last tile.
    if vocab % tv != 0:
        for cand in range(tv, 0, -128):
            if vocab % cand == 0:
                if cand * 2 >= tv:
                    tv = cand
                break
    mask_vocab = (vocab % tv != 0)

    ni = _cdiv(n, tm)
    nj = _cdiv(vocab, tv)

    vmem_est = _vmem_estimate(tm, tv, d_model, in_itemsize, out_itemsize)
    vmem_limit = int(min(max(int(1.3 * vmem_est) + (2 << 20), 32 << 20), vmem_cap))

    rows_pad = ni * tm
    cols_pad = nj * tv
    cost = pl.CostEstimate(
        flops=2 * 2 * rows_pad * d_model * cols_pad,       # matmul in both phases
        transcendentals=rows_pad * cols_pad + rows_pad,    # exp (phase 0) + log
        bytes_accessed=(n * d_model * in_itemsize                     # x (read once)
                        + 2 * ni * d_model * cols_pad * in_itemsize   # w re-read per row tile
                        + 2 * ni * cols_pad * 4                       # bias
                        + n * vocab * out_itemsize),                  # output write
    )

    kernel = functools.partial(_generator_kernel, vocab=vocab, tv=tv,
                               mask_vocab=mask_vocab)

    out2 = pl.pallas_call(
        kernel,
        out_shape=jax.ShapeDtypeStruct((n, vocab), out_dtype),
        grid_spec=pltpu.PrefetchScalarGridSpec(
            num_scalar_prefetch=0,
            grid=(ni, 2, nj),
            in_specs=[
                pl.BlockSpec((tm, d_model), lambda i, p, j: (i, 0)),   # x rows
                pl.BlockSpec((d_model, tv), lambda i, p, j: (0, j)),   # weight tile
                pl.BlockSpec((1, tv), lambda i, p, j: (0, j)),         # f32 bias tile
            ],
            # Phase 0: park on block (i, 0) (never written -> no flush);
            # phase 1: sweep (i, j) writing the final log-probs exactly once.
            out_specs=pl.BlockSpec((tm, tv), lambda i, p, j: (i, p * j)),
            scratch_shapes=[
                pltpu.VMEM((tm, 1), jnp.float32),   # running max
                pltpu.VMEM((tm, 1), jnp.float32),   # running sum-exp
                pltpu.VMEM((tm, 1), jnp.float32),   # logsumexp
            ],
        ),
        compiler_params=pltpu.CompilerParams(
            dimension_semantics=("parallel", "arbitrary", "arbitrary"),
            vmem_limit_bytes=vmem_limit,
        ),
        cost_estimate=cost,
    )(x2, w, b2)

    return out2.reshape(batch, seq, vocab)


def reference_forward(x, w, b):
    logits = jnp.einsum("bsd,dv->bsv", x, w) + b
    return jax.nn.log_softmax(logits, axis=-1)


if __name__ == "__main__":
    key = jax.random.PRNGKey(0)
    k_x, k_w, k_b = jax.random.split(key, 3)

    # Small, deliberately non-tile-multiple shapes: 18 rows, vocab 320
    # (not a multiple of 128) so the ragged-edge and masking paths run.
    batch, seq, d_model, vocab = 2, 9, 32, 320

    x = jax.random.normal(k_x, (batch, seq, d_model), dtype=jnp.float32)
    # PyTorch nn.Linear(d_model, vocab): weight (vocab, d_model), bias (vocab,).
    # Stored transposed as (d_model, vocab) so the kernel computes x @ w + b.
    w = jax.random.normal(k_w, (d_model, vocab), dtype=jnp.float32) * 0.05
    b = jax.random.normal(k_b, (vocab,), dtype=jnp.float32) * 0.05

    ref = reference_forward(x, w, b)

    # 1) Auto-tiled path (single row / vocab tile for this tiny shape).
    out_auto = jax.block_until_ready(generator_forward(x, w, b))
    assert out_auto.shape == (batch, seq, vocab)
    assert jnp.allclose(out_auto, ref, atol=1e-4, rtol=1e-4), "auto-tile mismatch"

    # 2) Explicit small tiles: exercises the multi-tile online logsumexp, the
    #    masked ragged last vocab tile and the ragged last row tile.
    out_tiled = jax.block_until_ready(
        generator_forward(x, w, b, tile_rows=16, tile_vocab=128))
    assert out_tiled.shape == (batch, seq, vocab)
    assert jnp.allclose(out_tiled, ref, atol=1e-4, rtol=1e-4), "tiled mismatch"

    print("KERNEL_OK")
</pallas_src>

<mosaic_0001>
module attributes {stable_mosaic.version = 11 : i64} {
  func.func @_generator_kernel(%arg0: i32, %arg1: i32, %arg2: i32, %arg3: memref<24x32xf32, #tpu.memory_space<vmem>>, %arg4: memref<32x384xf32, #tpu.memory_space<vmem>>, %arg5: memref<1x384xf32, #tpu.memory_space<vmem>>, %arg6: memref<24x384xf32, #tpu.memory_space<vmem>>, %arg7: memref<24x1xf32, #tpu.memory_space<vmem>>, %arg8: memref<24x1xf32, #tpu.memory_space<vmem>>, %arg9: memref<24x1xf32, #tpu.memory_space<vmem>>) attributes {dimension_semantics = [#tpu.dimension_semantics<parallel>, #tpu.dimension_semantics<arbitrary>, #tpu.dimension_semantics<arbitrary>], iteration_bounds = array<i64: 1, 2, 1>, scalar_prefetch = 0 : i64, scratch_operands = 3 : i64, tpu.core_type = #tpu.core_type<tc>, window_params = [{transform_indices = @transform_0, window_bounds = array<i64: 24, 32>}, {transform_indices = @transform_1, window_bounds = array<i64: 32, 384>}, {transform_indices = @transform_2, window_bounds = array<i64: 1, 384>}, {transform_indices = @transform_3, window_bounds = array<i64: 24, 384>}]} {
    %c0_i32 = arith.constant 0 : i32
    %0 = arith.cmpi eq, %arg1, %c0_i32 : i32
    %c0_i32_0 = arith.constant 0 : i32
    %1 = arith.cmpi eq, %arg2, %c0_i32_0 : i32
    %2 = arith.andi %0, %1 : i1
    %3 = arith.extui %2 : i1 to i32
    %c0_i32_1 = arith.constant 0 : i32
    %4 = arith.cmpi ne, %3, %c0_i32_1 : i32
    scf.if %4 {
      %cst_14 = arith.constant 0xFF800000 : f32
      %30 = vector.broadcast %cst_14 : f32 to vector<24x1xf32>
      %c0_15 = arith.constant 0 : index
      %c0_16 = arith.constant 0 : index
      %31 = vector.load %arg7[%c0_15, %c0_16] : memref<24x1xf32, #tpu.memory_space<vmem>>, vector<24x1xf32>
      tpu.vector_store %arg7[%c0_15, %c0_16], %30 {strides = array<i32>} : memref<24x1xf32, #tpu.memory_space<vmem>>, vector<24x1xf32>,
      %cst_17 = arith.constant 0.000000e+00 : f32
      %32 = vector.broadcast %cst_17 : f32 to vector<24x1xf32>
      %c0_18 = arith.constant 0 : index
      %c0_19 = arith.constant 0 : index
      %33 = vector.load %arg8[%c0_18, %c0_19] : memref<24x1xf32, #tpu.memory_space<vmem>>, vector<24x1xf32>
      tpu.vector_store %arg8[%c0_18, %c0_19], %32 {strides = array<i32>} : memref<24x1xf32, #tpu.memory_space<vmem>>, vector<24x1xf32>,
    } else {
    }
    %c0 = arith.constant 0 : index
    %c0_2 = arith.constant 0 : index
    %5 = vector.load %arg3[%c0, %c0_2] : memref<24x32xf32, #tpu.memory_space<vmem>>, vector<24x32xf32>
    %c0_3 = arith.constant 0 : index
    %c0_4 = arith.constant 0 : index
    %6 = vector.load %arg4[%c0_3, %c0_4] : memref<32x384xf32, #tpu.memory_space<vmem>>, vector<32x384xf32>
    %cst = arith.constant dense<0.000000e+00> : vector<24x384xf32>
    %7 = tpu.matmul %5, %6, %cst {dimension_numbers = #tpu.dot_dimension_numbers<[1], [0], [0], [1], [0, 0, 1, 1], [], []>} : vector<24x32xf32>, vector<32x384xf32>, vector<24x384xf32> -> vector<24x384xf32>
    %c0_5 = arith.constant 0 : index
    %c0_6 = arith.constant 0 : index
    %8 = vector.load %arg5[%c0_5, %c0_6] : memref<1x384xf32, #tpu.memory_space<vmem>>, vector<1x384xf32>
    %9 = vector.broadcast %8 : vector<1x384xf32> to vector<24x384xf32>
    %10 = arith.addf %7, %9 : vector<24x384xf32>
    %c384_i32 = arith.constant 384 : i32
    %11 = arith.muli %arg2, %c384_i32 : i32
    %12 = tpu.iota {dimensions = array<i32: 1>} : vector<24x384xi32>
    %13 = vector.broadcast %11 : i32 to vector<24x384xi32>
    %14 = arith.addi %13, %12 : vector<24x384xi32>
    %c320_i32 = arith.constant 320 : i32
    %15 = vector.broadcast %c320_i32 : i32 to vector<24x384xi32>
    %16 = arith.cmpi slt, %14, %15 : vector<24x384xi32>
    %cst_7 = arith.constant -1.000000e+30 : f32
    %17 = vector.broadcast %cst_7 : f32 to vector<24x384xf32>
    %18 = arith.select %16, %10, %17 : vector<24x384xi1>, vector<24x384xf32>
    %c0_i32_8 = arith.constant 0 : i32
    %19 = arith.cmpi eq, %arg1, %c0_i32_8 : i32
    %20 = arith.extui %19 : i1 to i32
    %c0_i32_9 = arith.constant 0 : i32
    %21 = arith.cmpi ne, %20, %c0_i32_9 : i32
    scf.if %21 {
      %c0_14 = arith.constant 0 : index
      %c0_15 = arith.constant 0 : index
      %30 = vector.load %arg7[%c0_14, %c0_15] : memref<24x1xf32, #tpu.memory_space<vmem>>, vector<24x1xf32>
      %cst_16 = arith.constant dense<0xFF800000> : vector<24xf32>
      %31 = vector.multi_reduction <maximumf>, %18, %cst_16 [1] : vector<24x384xf32> to vector<24xf32>
      %32 = vector.shape_cast %31 : vector<24xf32> to vector<24x1xf32>
      %33 = arith.maximumf %30, %32 : vector<24x1xf32>
      %34 = arith.subf %30, %33 : vector<24x1xf32>
      %35 = math.exp %34 : vector<24x1xf32>
      %c0_17 = arith.constant 0 : index
      %c0_18 = arith.constant 0 : index
      %36 = vector.load %arg8[%c0_17, %c0_18] : memref<24x1xf32, #tpu.memory_space<vmem>>, vector<24x1xf32>
      %37 = arith.mulf %35, %36 : vector<24x1xf32>
      %38 = vector.broadcast %33 : vector<24x1xf32> to vector<24x384xf32>
      %39 = arith.subf %18, %38 : vector<24x384xf32>
      %40 = math.exp %39 : vector<24x384xf32>
      %cst_19 = arith.constant dense<0.000000e+00> : vector<24xf32>
      %41 = vector.multi_reduction <add>, %40, %cst_19 [1] : vector<24x384xf32> to vector<24xf32>
      %42 = vector.shape_cast %41 : vector<24xf32> to vector<24x1xf32>
      %43 = arith.addf %37, %42 : vector<24x1xf32>
      %c0_20 = arith.constant 0 : index
      %c0_21 = arith.constant 0 : index
      %44 = vector.load %arg8[%c0_20, %c0_21] : memref<24x1xf32, #tpu.memory_space<vmem>>, vector<24x1xf32>
      tpu.vector_store %arg8[%c0_20, %c0_21], %43 {strides = array<i32>} : memref<24x1xf32, #tpu.memory_space<vmem>>, vector<24x1xf32>,
      %c0_22 = arith.constant 0 : index
      %c0_23 = arith.constant 0 : index
      %45 = vector.load %arg7[%c0_22, %c0_23] : memref<24x1xf32, #tpu.memory_space<vmem>>, vector<24x1xf32>
      tpu.vector_store %arg7[%c0_22, %c0_23], %33 {strides = array<i32>} : memref<24x1xf32, #tpu.memory_space<vmem>>, vector<24x1xf32>,
    } else {
    }
    %c0_i32_10 = arith.constant 0 : i32
    %22 = arith.cmpi eq, %arg1, %c0_i32_10 : i32
    %c0_i32_11 = arith.constant 0 : i32
    %23 = arith.cmpi eq, %arg2, %c0_i32_11 : i32
    %24 = arith.andi %22, %23 : i1
    %25 = arith.extui %24 : i1 to i32
    %c0_i32_12 = arith.constant 0 : i32
    %26 = arith.cmpi ne, %25, %c0_i32_12 : i32
    scf.if %26 {
      %c0_14 = arith.constant 0 : index
      %c0_15 = arith.constant 0 : index
      %30 = vector.load %arg7[%c0_14, %c0_15] : memref<24x1xf32, #tpu.memory_space<vmem>>, vector<24x1xf32>
      %c0_16 = arith.constant 0 : index
      %c0_17 = arith.constant 0 : index
      %31 = vector.load %arg8[%c0_16, %c0_17] : memref<24x1xf32, #tpu.memory_space<vmem>>, vector<24x1xf32>
      %32 = math.log %31 : vector<24x1xf32>
      %33 = arith.addf %30, %32 : vector<24x1xf32>
      %c0_18 = arith.constant 0 : index
      %c0_19 = arith.constant 0 : index
      %34 = vector.load %arg9[%c0_18, %c0_19] : memref<24x1xf32, #tpu.memory_space<vmem>>, vector<24x1xf32>
      tpu.vector_store %arg9[%c0_18, %c0_19], %33 {strides = array<i32>} : memref<24x1xf32, #tpu.memory_space<vmem>>, vector<24x1xf32>,
    } else {
    }
    %c1_i32 = arith.constant 1 : i32
    %27 = arith.cmpi eq, %arg1, %c1_i32 : i32
    %28 = arith.extui %27 : i1 to i32
    %c0_i32_13 = arith.constant 0 : i32
    %29 = arith.cmpi ne, %28, %c0_i32_13 : i32
    scf.if %29 {
      %c0_14 = arith.constant 0 : index
      %c0_15 = arith.constant 0 : index
      %30 = vector.load %arg9[%c0_14, %c0_15] : memref<24x1xf32, #tpu.memory_space<vmem>>, vector<24x1xf32>
      %31 = vector.broadcast %30 : vector<24x1xf32> to vector<24x384xf32>
      %32 = arith.subf %18, %31 : vector<24x384xf32>
      %c0_16 = arith.constant 0 : index
      %c0_17 = arith.constant 0 : index
      %33 = vector.load %arg6[%c0_16, %c0_17] : memref<24x384xf32, #tpu.memory_space<vmem>>, vector<24x384xf32>
      tpu.vector_store %arg6[%c0_16, %c0_17], %32 {strides = array<i32>} : memref<24x384xf32, #tpu.memory_space<vmem>>, vector<24x384xf32>,
    } else {
    }
    return
  }
  func.func @transform_0(%arg0: i32, %arg1: i32, %arg2: i32) -> (i32, i32) {
    %c0_i32 = arith.constant 0 : i32
    %c0_i32_0 = arith.constant 0 : i32
    return %arg0, %c0_i32 : i32, i32
  }
  func.func @transform_1(%arg0: i32, %arg1: i32, %arg2: i32) -> (i32, i32) {
    %c0_i32 = arith.constant 0 : i32
    %c0_i32_0 = arith.constant 0 : i32
    return %c0_i32, %arg2 : i32, i32
  }
  func.func @transform_2(%arg0: i32, %arg1: i32, %arg2: i32) -> (i32, i32) {
    %c0_i32 = arith.constant 0 : i32
    %c0_i32_0 = arith.constant 0 : i32
    return %c0_i32, %arg2 : i32, i32
  }
  func.func @transform_3(%arg0: i32, %arg1: i32, %arg2: i32) -> (i32, i32) {
    %0 = arith.muli %arg1, %arg2 : i32
    %c0_i32 = arith.constant 0 : i32
    return %arg0, %0 : i32, i32
  }
}

</mosaic_0001>

<llo_original>
// kernel: tpu_custom_call.1
$region0: #{tpu_custom_call.1}
  #allocation0 [shape = 'u32[]', space=smem, size = 0x4, offset = 0x4, fixed_abs, tag = 'smem constant byte address 0x4 - core index']
  #allocation1 [shape = 'u32[144,128]{1,0:T(1,128)}', space=vmem, size = 0x12000, scoped, tag = 'internal scratch']
  #allocation2 [shape = 'f32[24,1]{1,0:T(8,128)}', space=vmem, size = 0x3000, scoped, tag = 'scratch operand']
  #allocation3 [shape = 'f32[24,1]{1,0:T(8,128)}', space=vmem, size = 0x3000, scoped, tag = 'scratch operand']
  #allocation4 [shape = 'f32[24,1]{1,0:T(8,128)}', space=vmem, size = 0x3000, scoped, tag = 'scratch operand']
  %s0 = inlined_call_operand.hbm [shape: f32[18,32], index: 0, kind: input, shape index: {}]
  %s1 = inlined_call_operand.hbm [shape: f32[32,320], index: 1, kind: input, shape index: {}]
  %s2 = inlined_call_operand.vmem [shape: f32[1,320], index: 2, kind: input, shape index: {}]
  %s3 = inlined_call_operand.hbm [shape: f32[18,320], index: 3, kind: output, shape index: {}]
  %s4 = sld [smem:[#allocation0]]
  $region69: #{tpu_custom_call.1} parent=0
    _
  %s6 = ssub.s32 1, %s4
  %s7 = scalar_select 0, %s6, %s4
  $region1: #{tpu_custom_call.1} parent=0
    #allocation5 [shape = 'u8[12288]{0}', space=vmem, size = 0x3000, scoped, tag = 'input window, operand 0, single buffered']
    #allocation6 [shape = 's32[2]{0}', space=sflag, size = 0x8, scoped, tag = 'scoped memory for tpu_custom_call.1']
    #allocation7 [shape = 's32[2]{0}', space=sflag, size = 0x8, scoped, tag = 'scoped memory for tpu_custom_call.1']
    #allocation8 [shape = 'u8[49152]{0}', space=vmem, size = 0xc000, scoped, tag = 'input window, operand 1, single buffered']
    #allocation9 [shape = 's32[1]{0}', space=sflag, size = 0x4, scoped, tag = 'scoped memory for tpu_custom_call.1']
    #allocation10 [shape = 'u8[73728]{0}', space=vmem, size = 0x12000, scoped, tag = 'output window, operand 0']
    %8 = vsyncpa [#allocation6], 0
    %9 = vsyncpa [#allocation9], 0
    %10 = vsyncpa [#allocation7], 0
    %s11 = scalar_lea.sflag [#allocation7], 1
    %12 = vsyncpa %s11, 0
    loop: start=0, step=1, limit=4
    $region2: #{tpu_custom_call.1} parent=1 // loop_pre_header
      _
    $region3: #{tpu_custom_call.1} parent=1 // loop_header
      %s14 = sphi 0, %s18
      %p15 = scmp.ge.s32.totalorder %s14, 4
      %s21 = sphi 0, %s40
      %s22 = sphi 0, %s36
      %s23 = sphi 0, %s32
      %s24 = sphi 0, %s21
      %s25 = sphi 0, %s22
      %s26 = sphi 0, %s23
      %s27 = sphi 0, %s24
      %s28 = sphi 0, %s25
      %s29 = sphi 0, %s26
      %s43 = sphi 0, %s45
      %s46 = sphi 0, %s43
      %s47 = sphi 0, %s46
      %s63 = sphi 0, %s47
      %s69 = sphi 0, %s71
      %s72 = sphi 0, %s69
      %s73 = sphi 0, %s72
      %s89 = sphi 0, %s73
      %s95 = sphi 0, %s97
      %s98 = sphi 0, %s95
      %s99 = sphi 0, %s98
      %s115 = sphi 0, %s99
      %s125 = sphi 0, %s127
      %s128 = sphi 0, %s125
      %s129 = sphi 0, %s128
      %s145 = sphi 0, %s129
    $region4: #{tpu_custom_call.1} parent=1 // loop_header_branch
      %17 = sbr.rel (%p15) target = $region8
    $region5: #{tpu_custom_call.1} parent=1 // loop_body
      %s19 = ssub.s32 %s14, 1
      %s20 = ssub.s32 %s14, 2
      %s30 = sadd.s32 1, %s23
      %p31 = scmp.ge.s32.totalorder %s30, 1
      %s32 = scalar_select %p31, 0, %s30
      %s33 = sadd.s32 1, %s22
      %s34 = scalar_select %p31, %s33, %s22
      %p35 = scmp.ge.s32.totalorder %s34, 2
      %s36 = scalar_select %p35, 0, %s34
      %s37 = sadd.s32 1, %s21
      %s38 = scalar_select %p35, %s37, %s21
      %p39 = scmp.ge.s32.totalorder %s38, 1
      %s40 = scalar_select %p39, 0, %s38
      %s41 = ssub.s32 %s21, %s40
      %p42 = scmp.eq.s32.totalorder %s41, 0
      %s44 = sadd.s32 %s43, 1
      %s45 = scalar_select %p42, %s43, %s44
      %p48 = pneg %p42
      %p49 = scmp.eq.s32.totalorder %s14, 1
      %p50 = por %p48, %p49
      %p51 = scmp.ne.s32.totalorder %s43, %s46
      %p52 = scmp.eq.s32.totalorder %s14, 0
      %p53 = por %p51, %p52
      %p54 = scmp.ne.s32.totalorder %s43, %s46
      %p55 = scmp.eq.s32.totalorder %s19, 1
      %p56 = por %p54, %p55
      %p57 = scmp.ne.s32.totalorder %s46, %s47
      %p58 = scmp.eq.s32.totalorder %s19, 0
      %p59 = por %p57, %p58
      %p60 = scmp.ne.s32.totalorder %s46, %s47
      %p61 = scmp.eq.s32.totalorder %s20, 1
      %p62 = por %p60, %p61
      %p64 = scmp.ne.s32.totalorder %s47, %s63
      %p65 = scmp.eq.s32.totalorder %s20, 0
      %p66 = por %p64, %p65
      %s67 = ssub.s32 %s23, %s32
      %p68 = scmp.eq.s32.totalorder %s67, 0
      %s70 = sadd.s32 %s69, 1
      %s71 = scalar_select %p68, %s69, %s70
      %p74 = pneg %p68
      %p75 = scmp.eq.s32.totalorder %s14, 1
      %p76 = por %p74, %p75
      %p77 = scmp.ne.s32.totalorder %s69, %s72
      %p78 = scmp.eq.s32.totalorder %s14, 0
      %p79 = por %p77, %p78
      %p80 = scmp.ne.s32.totalorder %s69, %s72
      %p81 = scmp.eq.s32.totalorder %s19, 1
      %p82 = por %p80, %p81
      %p83 = scmp.ne.s32.totalorder %s72, %s73
      %p84 = scmp.eq.s32.totalorder %s19, 0
      %p85 = por %p83, %p84
      %p86 = scmp.ne.s32.totalorder %s72, %s73
      %p87 = scmp.eq.s32.totalorder %s20, 1
      %p88 = por %p86, %p87
      %p90 = scmp.ne.s32.totalorder %s73, %s89
      %p91 = scmp.eq.s32.totalorder %s20, 0
      %p92 = por %p90, %p91
      %s93 = ssub.s32 %s23, %s32
      %p94 = scmp.eq.s32.totalorder %s93, 0
      %s96 = sadd.s32 %s95, 1
      %s97 = scalar_select %p94, %s95, %s96
      %p100 = pneg %p94
      %p101 = scmp.eq.s32.totalorder %s14, 1
      %p102 = por %p100, %p101
      %p103 = scmp.ne.s32.totalorder %s95, %s98
      %p104 = scmp.eq.s32.totalorder %s14, 0
      %p105 = por %p103, %p104
      %p106 = scmp.ne.s32.totalorder %s95, %s98
      %p107 = scmp.eq.s32.totalorder %s19, 1
      %p108 = por %p106, %p107
      %p109 = scmp.ne.s32.totalorder %s98, %s99
      %p110 = scmp.eq.s32.totalorder %s19, 0
      %p111 = por %p109, %p110
      %p112 = scmp.ne.s32.totalorder %s98, %s99
      %p113 = scmp.eq.s32.totalorder %s20, 1
      %p114 = por %p112, %p113
      %p116 = scmp.ne.s32.totalorder %s99, %s115
      %p117 = scmp.eq.s32.totalorder %s20, 0
      %p118 = por %p116, %p117
      %s119 = smul.u32 %s22, %s23
      %s120 = smul.u32 %s36, %s32
      %s121 = ssub.s32 %s21, %s40
      %s122 = ssub.s32 %s119, %s120
      %s123 = sor.u32 %s121, %s122
      %p124 = scmp.eq.s32.totalorder %s123, 0
      %s126 = sadd.s32 %s125, 1
      %s127 = scalar_select %p124, %s125, %s126
      %p130 = pneg %p124
      %p131 = scmp.eq.s32.totalorder %s14, 1
      %p132 = por %p130, %p131
      %p133 = scmp.ne.s32.totalorder %s125, %s128
      %p134 = scmp.eq.s32.totalorder %s14, 0
      %p135 = por %p133, %p134
      %p136 = scmp.ne.s32.totalorder %s125, %s128
      %p137 = scmp.eq.s32.totalorder %s19, 1
      %p138 = por %p136, %p137
      %p139 = scmp.ne.s32.totalorder %s128, %s129
      %p140 = scmp.eq.s32.totalorder %s19, 0
      %p141 = por %p139, %p140
      %p142 = scmp.ne.s32.totalorder %s128, %s129
      %p143 = scmp.eq.s32.totalorder %s20, 1
      %p144 = por %p142, %p143
      %p146 = scmp.ne.s32.totalorder %s129, %s145
      %p147 = scmp.eq.s32.totalorder %s20, 0
      %p148 = por %p146, %p147
      %p149 = scmp.le.s32.totalorder 1, %s14
      %p150 = scmp.lt.s32.totalorder %s14, 3
      %p151 = pnand %p149, %p150
      %p152 = pneg %p151
      // Predicated region
      $region9: #{tpu_custom_call.1} parent=5 // pred_check
        _
      $region10: #{tpu_custom_call.1} parent=5 // pred_check_branch
        %154 = sbr.rel (%p151) target = $region12
      $region11: #{tpu_custom_call.1} parent=5 // pred_region
        %s155 = ssub.s32 %s14, 1
        // Predicated region
        $region13: #{tpu_custom_call.1} parent=11 // pred_check
          %p156 = pneg %p59
        $region14: #{tpu_custom_call.1} parent=11 // pred_check_branch
          %158 = sbr.rel (%p156) target = $region16
        $region15: #{tpu_custom_call.1} parent=11 // pred_region
          %s159 = smul.u32 3, %s24
          %s161 = ssub.s32 384, 384
          %162 = vsyncadd [#allocation6], %s161
          %s163 = smul.addr %s159, 128
          %s164 = scalar_lea.hbm %s0, %s163
          %s165 = sshll.u32 [#allocation5], 4
          %s166 = int_to_ptr.vmem [resolvable:$true] %s165
          %171 = dma.hbm_to_vmem [thread:$0]  %s164, 384, %s166, [#allocation6], 128, 128, 8
        $region16: #{tpu_custom_call.1} parent=11 // pred_fallthru
          _
        // Predicated region
        $region17: #{tpu_custom_call.1} parent=11 // pred_check
          %p172 = pneg %p85
        $region18: #{tpu_custom_call.1} parent=11 // pred_check_branch
          %174 = sbr.rel (%p172) target = $region20
        $region19: #{tpu_custom_call.1} parent=11 // pred_region
          %s175 = smul.u32 3, %s26
          %s177 = ssub.s32 1536, 1536
          %178 = vsyncadd [#allocation9], %s177
          %s179 = smul.addr %s175, 128
          %s180 = scalar_lea.hbm %s1, %s179
          %s181 = sshll.u32 [#allocation8], 4
          %s182 = int_to_ptr.vmem [resolvable:$true] %s181
          %187 = dma.hbm_to_vmem [thread:$0]  %s180, 1536, %s182, [#allocation9], 384, 384, 24
        $region20: #{tpu_custom_call.1} parent=11 // pred_fallthru
          _
        // Predicated region
        $region21: #{tpu_custom_call.1} parent=11 // pred_check
          %p188 = pneg %p111
        $region22: #{tpu_custom_call.1} parent=11 // pred_check_branch
          %190 = sbr.rel (%p188) target = $region24
        $region23: #{tpu_custom_call.1} parent=11 // pred_region
          %s191 = smul.u32 3, %s26
          %p192 = scmp.lt.s32.totalorder %s191, 2
          %s193 = scalar_select %p192, %s191, 2
          %s194 = scalar_lea.vmem %s2, %s193
          %s195 = smul.u32 3, %s26
        $region24: #{tpu_custom_call.1} parent=11 // pred_fallthru
          _
      $region12: #{tpu_custom_call.1} parent=5 // pred_fallthru
        _
      %p196 = scmp.lt.s32.totalorder %s14, 2
      // Predicated region
      $region25: #{tpu_custom_call.1} parent=5 // pred_check
        %p197 = pneg %p196
      $region26: #{tpu_custom_call.1} parent=5 // pred_check_branch
        %199 = sbr.rel (%p197) target = $region28
      $region27: #{tpu_custom_call.1} parent=5 // pred_region
        _
      $region28: #{tpu_custom_call.1} parent=5 // pred_fallthru
        _
      %p200 = scmp.le.s32.totalorder 1, %s14
      %p201 = scmp.lt.s32.totalorder %s14, 3
      %p202 = pnand %p200, %p201
      %p203 = pneg %p202
      // Predicated region
      $region29: #{tpu_custom_call.1} parent=5 // pred_check
        _
      $region30: #{tpu_custom_call.1} parent=5 // pred_check_branch
        %205 = sbr.rel (%p202) target = $region32
      $region31: #{tpu_custom_call.1} parent=5 // pred_region
        %s206 = ssub.s32 %s14, 1
        // Predicated region
        $region33: #{tpu_custom_call.1} parent=31 // pred_check
          %p207 = pneg %p59
        $region34: #{tpu_custom_call.1} parent=31 // pred_check_branch
          %209 = sbr.rel (%p207) target = $region36
        $region35: #{tpu_custom_call.1} parent=31 // pred_region
          %210 = dma.done [#allocation6], 384
        $region36: #{tpu_custom_call.1} parent=31 // pred_fallthru
          _
        // Predicated region
        $region37: #{tpu_custom_call.1} parent=31 // pred_check
          %p211 = pneg %p85
        $region38: #{tpu_custom_call.1} parent=31 // pred_check_branch
          %213 = sbr.rel (%p211) target = $region40
        $region39: #{tpu_custom_call.1} parent=31 // pred_region
          %214 = dma.done [#allocation9], 1536
        $region40: #{tpu_custom_call.1} parent=31 // pred_fallthru
          _
        %p215 = pneg %p59
        %p216 = pneg %p56
        %p217 = pneg %p85
        %p218 = pneg %p82
        %s219 = smul.u32 3, %s26
        %p220 = scmp.lt.s32.totalorder %s219, 2
        %s221 = scalar_select %p220, %s219, 2
        %s222 = scalar_lea.vmem %s2, %s221
        %p223 = pneg %p111
        %p224 = pneg %p108
        %p225 = pneg %p141
        %p226 = pneg %p138
        %s227 = sand.u32 %s128, 1
        %s228 = scalar_lea.sflag [#allocation7], %s227
        %s229 = sand.u32 %s128, 1
        %s230 = smul.addr %s229, 72
        %s231 = scalar_lea.vmem [#allocation10], %s230
        %s232 = smul.u32 3, %s24
        %s233 = smul.u32 3, %s26
        %s234 = smul.u32 3, %s26
        %p235 = scmp.lt.s32.totalorder %s234, 2
        %s236 = scalar_select %p235, %s234, 2
        %s237 = scalar_lea.vmem %s2, %s236
        %s238 = smul.u32 3, %s26
        %s239 = smul.u32 %s25, %s26
        %s240 = smul.u32 3, %s24
        %s241 = smul.u32 3, %s239
        %p242 = scmp.eq.s32.totalorder %s25, 0
        %p243 = scmp.eq.s32.totalorder %s26, 0
        %p244 = pnand %p242, %p243
        %p245 = pneg %p244
        // Predicated region
        $region41: #{tpu_custom_call.1} parent=31 // pred_check
          _
        $region42: #{tpu_custom_call.1} parent=31 // pred_check_branch
          %247 = sbr.rel (%p244) target = $region44
        $region43: #{tpu_custom_call.1} parent=31 // pred_region
          %vm248 = vcmask 7168
          %249 = vst.msk [vmem:[#allocation2] sm:$0xff] %vm248, -inf
          %250 = vst.msk [vmem:[#allocation2 + $0x8] sm:$0xff] %vm248, -inf
          %251 = vst.msk [vmem:[#allocation2 + $0x10] sm:$0xff] %vm248, -inf
          %252 = vst.msk [vmem:[#allocation3] sm:$0xff] %vm248, 0.0
          %253 = vst.msk [vmem:[#allocation3 + $0x8] sm:$0xff] %vm248, 0.0
          %254 = vst.msk [vmem:[#allocation3 + $0x10] sm:$0xff] %vm248, 0.0
        $region44: #{tpu_custom_call.1} parent=31 // pred_fallthru
          _
        %v255 = vld [vmem:[#allocation5] sm:$0xff]
        %v256 = vld [vmem:[#allocation5 + $0x8] sm:$0xff]
        %v257 = vld [vmem:[#allocation5 + $0x10] sm:$0xff]
        %v258 = vld [vmem:[#allocation8] sm:$0xff]
        %v259 = vld [vmem:[#allocation8 + $0x8] sm:$0xff]
        %v260 = vld [vmem:[#allocation8 + $0x10] sm:$0xff]
        %v261 = vld [vmem:[#allocation8 + $0x18] sm:$0xff]
        %v262 = vld [vmem:[#allocation8 + $0x20] sm:$0xff]
        %v263 = vld [vmem:[#allocation8 + $0x28] sm:$0xff]
        %v264 = vld [vmem:[#allocation8 + $0x30] sm:$0xff]
        %v265 = vld [vmem:[#allocation8 + $0x38] sm:$0xff]
        %v266 = vld [vmem:[#allocation8 + $0x40] sm:$0xff]
        %v267 = vld [vmem:[#allocation8 + $0x48] sm:$0xff]
        %v268 = vld [vmem:[#allocation8 + $0x50] sm:$0xff]
        %v269 = vld [vmem:[#allocation8 + $0x58] sm:$0xff]
        %v270 = vld [vmem:[%s237] sm:$0x7]
        %v272 = vlaneseq
        %v273 = vshrl.u32 %v272, 7
        %v274 = vsub.s32 0, %v273
        %v275 = vrot.slane %v270, %v274
        %v276 = vlaneseq
        %v277 = vshrl.u32 %v276, 7
        %v278 = vsub.s32 1, %v277
        %v279 = vrot.slane %v270, %v278
        %v280 = vlaneseq
        %v281 = vshrl.u32 %v280, 7
        %v282 = vsub.s32 2, %v281
        %v283 = vrot.slane %v270, %v282
        %vm287 = vcmask 261120
        %v289 = vsel %vm287, %v255, 0
        %v292 = vsel %vm287, %v256, 0
        %v295 = vsel %vm287, %v257, 0
        %297 = vmatprep.subr.mxu0 %v259
        %298 = vmatpush1.msra.mxu0 %v258
        %299 = vmatprep.subr.mxu0 %v262
        %300 = vmatpush1.msra.mxu0 %v261
        %301 = vmatprep.subr.mxu0 %v265
        %302 = vmatpush1.msra.mxu0 %v264
        %303 = vmatprep.subr.mxu0 %v268
        %304 = vmatpush1.msra.mxu0 %v267
        %305 = vmatprep.subr.mxu0 0.0
        %306 = vmatpush1.msra.mxu0 0.0
        %307 = vmatprep.subr.mxu0 0.0
        %308 = vmatpush1.msra.mxu0 0.0
        %309 = vmatprep.subr.mxu0 0.0
        %310 = vmatpush1.msra.mxu0 0.0
        %311 = vmatprep.subr.mxu0 0.0
        %312 = vmatpush1.msra.mxu0 0.0
        %313 = vmatprep.subr.mxu0 0.0
        %314 = vmatpush1.msra.mxu0 0.0
        %315 = vmatprep.subr.mxu0 0.0
        %316 = vmatpush1.msra.mxu0 0.0
        %317 = vmatprep.subr.mxu0 0.0
        %318 = vmatpush1.msra.mxu0 0.0
        %319 = vmatprep.subr.mxu0 0.0
        %320 = vmatpush1.msra.mxu0 0.0
        %321 = vmatprep.subr.mxu0 0.0
        %322 = vmatpush1.msra.mxu0 0.0
        %323 = vmatprep.subr.mxu0 0.0
        %324 = vmatpush1.msra.mxu0 0.0
        %325 = vmatprep.subr.mxu0 0.0
        %326 = vmatpush1.msra.mxu0 0.0
        %327 = vmatprep.subr.mxu0 0.0
        %328 = vmatpush1.msra.mxu0 0.0
        %329 = vmatprep.subr.mxu0 0.0
        %330 = vmatpush1.msra.mxu0 0.0
        %331 = vmatprep.subr.mxu0 0.0
        %332 = vmatpush1.msra.mxu0 0.0
        %333 = vmatprep.subr.mxu0 0.0
        %334 = vmatpush1.msra.mxu0 0.0
        %335 = vmatprep.subr.mxu0 0.0
        %336 = vmatpush1.msra.mxu0 0.0
        %337 = vmatprep.subr.mxu0 0.0
        %338 = vmatpush1.msra.mxu0 0.0
        %339 = vmatprep.subr.mxu0 0.0
        %340 = vmatpush1.msra.mxu0 0.0
        %341 = vmatprep.subr.mxu0 0.0
        %342 = vmatpush1.msra.mxu0 0.0
        %343 = vmatprep.subr.mxu0 0.0
        %344 = vmatpush1.msra.mxu0 0.0
        %345 = vmatprep.subr.mxu0 0.0
        %346 = vmatpush1.msra.mxu0 0.0
        %347 = vmatprep.subr.mxu0 0.0
        %348 = vmatpush1.msra.mxu0 0.0
        %349 = vmatprep.subr.mxu0 0.0
        %350 = vmatpush1.msra.mxu0 0.0
        %351 = vmatprep.subr.mxu0 0.0
        %352 = vmatpush1.msra.mxu0 0.0
        %353 = vmatprep.subr.mxu0 0.0
        %354 = vmatpush1.msra.mxu0 0.0
        %355 = vmatprep.subr.mxu0 0.0
        %356 = vmatpush1.msra.mxu0 0.0
        %357 = vmatprep.subr.mxu0 0.0
        %358 = vmatpush1.msra.mxu0 0.0
        %359 = vmatprep.subr.mxu0 0.0
        %360 = vmatpush1.msra.mxu0 0.0
        %361 = vmatprep.mubr.f32.mxu0 0.0
        %362 = vmatmul.mubr.f32.gmra.mrb[0].mxu0 %v289
        %v363 = vpop.f32.mrb[0].mxu0
        %v364 = vadd.f32 %v275, %v363
        %v365 = vpop.f32.mrb[0].mxu0
        %v366 = vadd.f32 %v279, %v365
        %367 = vmatprep.mubr.f32.mxu0 0.0
        %368 = vmatmul.mubr.f32.gmra.mrb[0].mxu0 %v292
        %v369 = vpop.f32.mrb[0].mxu0
        %v370 = vadd.f32 %v275, %v369
        %v371 = vpop.f32.mrb[0].mxu0
        %v372 = vadd.f32 %v279, %v371
        %373 = vmatprep.mubr.f32.mxu0 0.0
        %374 = vmatmul.mubr.f32.gmra.mrb[0].mxu0 %v295
        %v375 = vpop.f32.mrb[0].mxu0
        %v376 = vadd.f32 %v275, %v375
        %v377 = vpop.f32.mrb[0].mxu0
        %v378 = vadd.f32 %v279, %v377
        %379 = vdwg.mxu0
        %380 = vmatprep.subr.mxu0 0.0
        %381 = vmatpush1.msra.mxu0 %v260
        %382 = vmatprep.subr.mxu0 0.0
        %383 = vmatpush1.msra.mxu0 %v263
        %384 = vmatprep.subr.mxu0 0.0
        %385 = vmatpush1.msra.mxu0 %v266
        %386 = vmatprep.subr.mxu0 0.0
        %387 = vmatpush1.msra.mxu0 %v269
        %388 = vmatprep.subr.mxu0 0.0
        %389 = vmatpush1.msra.mxu0 0.0
        %390 = vmatprep.subr.mxu0 0.0
        %391 = vmatpush1.msra.mxu0 0.0
        %392 = vmatprep.subr.mxu0 0.0
        %393 = vmatpush1.msra.mxu0 0.0
        %394 = vmatprep.subr.mxu0 0.0
        %395 = vmatpush1.msra.mxu0 0.0
        %396 = vmatprep.subr.mxu0 0.0
        %397 = vmatpush1.msra.mxu0 0.0
        %398 = vmatprep.subr.mxu0 0.0
        %399 = vmatpush1.msra.mxu0 0.0
        %400 = vmatprep.subr.mxu0 0.0
        %401 = vmatpush1.msra.mxu0 0.0
        %402 = vmatprep.subr.mxu0 0.0
        %403 = vmatpush1.msra.mxu0 0.0
        %404 = vmatprep.subr.mxu0 0.0
        %405 = vmatpush1.msra.mxu0 0.0
        %406 = vmatprep.subr.mxu0 0.0
        %407 = vmatpush1.msra.mxu0 0.0
        %408 = vmatprep.subr.mxu0 0.0
        %409 = vmatpush1.msra.mxu0 0.0
        %410 = vmatprep.subr.mxu0 0.0
        %411 = vmatpush1.msra.mxu0 0.0
        %412 = vmatprep.subr.mxu0 0.0
        %413 = vmatpush1.msra.mxu0 0.0
        %414 = vmatprep.subr.mxu0 0.0
        %415 = vmatpush1.msra.mxu0 0.0
        %416 = vmatprep.subr.mxu0 0.0
        %417 = vmatpush1.msra.mxu0 0.0
        %418 = vmatprep.subr.mxu0 0.0
        %419 = vmatpush1.msra.mxu0 0.0
        %420 = vmatprep.subr.mxu0 0.0
        %421 = vmatpush1.msra.mxu0 0.0
        %422 = vmatprep.subr.mxu0 0.0
        %423 = vmatpush1.msra.mxu0 0.0
        %424 = vmatprep.subr.mxu0 0.0
        %425 = vmatpush1.msra.mxu0 0.0
        %426 = vmatprep.subr.mxu0 0.0
        %427 = vmatpush1.msra.mxu0 0.0
        %428 = vmatprep.subr.mxu0 0.0
        %429 = vmatpush1.msra.mxu0 0.0
        %430 = vmatprep.subr.mxu0 0.0
        %431 = vmatpush1.msra.mxu0 0.0
        %432 = vmatprep.subr.mxu0 0.0
        %433 = vmatpush1.msra.mxu0 0.0
        %434 = vmatprep.subr.mxu0 0.0
        %435 = vmatpush1.msra.mxu0 0.0
        %436 = vmatprep.subr.mxu0 0.0
        %437 = vmatpush1.msra.mxu0 0.0
        %438 = vmatprep.subr.mxu0 0.0
        %439 = vmatpush1.msra.mxu0 0.0
        %440 = vmatprep.subr.mxu0 0.0
        %441 = vmatpush1.msra.mxu0 0.0
        %442 = vmatprep.subr.mxu0 0.0
        %443 = vmatpush1.msra.mxu0 0.0
        %444 = vmatprep.mubr.f32.mxu0 0.0
        %445 = vmatmul.mubr.f32.gmra.mrb[0].mxu0 %v289
        %v446 = vpop.f32.mrb[0].mxu0
        %v447 = vadd.f32 %v283, %v446
        %v448 = vpop.f32.mrb[0].mxu0
        %449 = vmatprep.mubr.f32.mxu0 0.0
        %450 = vmatmul.mubr.f32.gmra.mrb[0].mxu0 %v292
        %v451 = vpop.f32.mrb[0].mxu0
        %v452 = vadd.f32 %v283, %v451
        %v453 = vpop.f32.mrb[0].mxu0
        %454 = vmatprep.mubr.f32.mxu0 0.0
        %455 = vmatmul.mubr.f32.gmra.mrb[0].mxu0 %v295
        %v456 = vpop.f32.mrb[0].mxu0
        %v457 = vadd.f32 %v283, %v456
        %v458 = vpop.f32.mrb[0].mxu0
        %459 = vdwg.mxu0
        %s460 = smul.u32 %s26, 384
        %v461 = vlaneseq
        %v462 = vand.u32 %v461, 127
        %v463 = vadd.s32 %v462, 128
        %v464 = vadd.s32 %v462, 256
        %v465 = vstv %s460
        %v466 = vadd.s32 %v465, %v462
        %v467 = vadd.s32 %v465, %v463
        %v468 = vadd.s32 %v465, %v464
        %vm469 = vcmp.lt.s32.totalorder %v466, 320
        %vm470 = vcmp.lt.s32.totalorder %v467, 320
        %vm471 = vcmp.lt.s32.totalorder %v468, 320
        %v472 = vsel %vm469, %v364, -1e+30
        %v473 = vsel %vm470, %v366, -1e+30
        %v474 = vsel %vm471, %v447, -1e+30
        %v475 = vsel %vm469, %v370, -1e+30
        %v476 = vsel %vm470, %v372, -1e+30
        %v477 = vsel %vm471, %v452, -1e+30
        %v478 = vsel %vm469, %v376, -1e+30
        %v479 = vsel %vm470, %v378, -1e+30
        %v480 = vsel %vm471, %v457, -1e+30
        // Predicated region
        $region45: #{tpu_custom_call.1} parent=31 // pred_check
          %p481 = pneg %p242
        $region46: #{tpu_custom_call.1} parent=31 // pred_check_branch
          %483 = sbr.rel (%p481) target = $region48
        $region47: #{tpu_custom_call.1} parent=31 // pred_region
          %v484 = vld [vmem:[#allocation2] sm:$0xff]
          %v485 = vld [vmem:[#allocation2 + $0x8] sm:$0xff]
          %v486 = vld [vmem:[#allocation2 + $0x10] sm:$0xff]
          %v487 = vmax.f32 %v472, %v474
          %v488 = vmax.f32 %v487, %v473
          %489 = vmax.xlane.f32.xlu0 %v488
          %v490 = vpop.xlane.xlu0 %489
          %v491 = vmax.f32 %v475, %v477
          %v492 = vmax.f32 %v491, %v476
          %493 = vmax.xlane.f32.xlu0 %v492
          %v494 = vpop.xlane.xlu0 %493
          %v495 = vmax.f32 %v478, %v480
          %v496 = vmax.f32 %v495, %v479
          %497 = vmax.xlane.f32.xlu0 %v496
          %v498 = vpop.xlane.xlu0 %497
          %v499 = vmax.f32 %v484, %v490
          %v500 = vmax.f32 %v485, %v494
          %v501 = vmax.f32 %v486, %v498
          %v502 = vsub.f32 %v484, %v499
          %v503 = vsub.f32 %v485, %v500
          %v504 = vsub.f32 %v486, %v501
          %v505 = vmul.f32 %v502, 1.442695
          %v506 = vpow.pop %v505
          %v507 = vmul.f32 %v503, 1.442695
          %v508 = vpow.pop %v507
          %v509 = vmul.f32 %v504, 1.442695
          %v510 = vpow.pop %v509
          %v511 = vld [vmem:[#allocation3] sm:$0xff]
          %v512 = vld [vmem:[#allocation3 + $0x8] sm:$0xff]
          %v513 = vld [vmem:[#allocation3 + $0x10] sm:$0xff]
          %v514 = vmul.f32 %v506, %v511
          %v515 = vmul.f32 %v508, %v512
          %v516 = vmul.f32 %v510, %v513
          %518 = vset.pattern.permute.xlu0 0
          %519 = vperm.xlu0 %518, %v499
          %v520 = vpop.permute.xlu0 %519
          %523 = vset.pattern.permute.xlu0 0
          %524 = vperm.xlu0 %523, %v500
          %v525 = vpop.permute.xlu0 %524
          %528 = vset.pattern.permute.xlu0 0
          %529 = vperm.xlu0 %528, %v501
          %v530 = vpop.permute.xlu0 %529
          %v532 = vsub.f32 %v472, %v520
          %v533 = vsub.f32 %v473, %v520
          %v534 = vsub.f32 %v474, %v520
          %v535 = vsub.f32 %v475, %v525
          %v536 = vsub.f32 %v476, %v525
          %v537 = vsub.f32 %v477, %v525
          %v538 = vsub.f32 %v478, %v530
          %v539 = vsub.f32 %v479, %v530
          %v540 = vsub.f32 %v480, %v530
          %v541 = vmul.f32 %v532, 1.442695
          %v542 = vpow.pop %v541
          %v543 = vmul.f32 %v533, 1.442695
          %v544 = vpow.pop %v543
          %v545 = vmul.f32 %v534, 1.442695
          %v546 = vpow.pop %v545
          %v547 = vmul.f32 %v535, 1.442695
          %v548 = vpow.pop %v547
          %v549 = vmul.f32 %v536, 1.442695
          %v550 = vpow.pop %v549
          %v551 = vmul.f32 %v537, 1.442695
          %v552 = vpow.pop %v551
          %v553 = vmul.f32 %v538, 1.442695
          %v554 = vpow.pop %v553
          %v555 = vmul.f32 %v539, 1.442695
          %v556 = vpow.pop %v555
          %v557 = vmul.f32 %v540, 1.442695
          %v558 = vpow.pop %v557
          %v559 = vadd.f32 %v542, %v544
          %v560 = vadd.f32 %v559, %v546
          %561 = vadd.xlane.f32.xlu0 %v560
          %v562 = vpop.xlane.xlu0 %561
          %v563 = vadd.f32 %v548, %v550
          %v564 = vadd.f32 %v563, %v552
          %565 = vadd.xlane.f32.xlu0 %v564
          %v566 = vpop.xlane.xlu0 %565
          %v567 = vadd.f32 %v554, %v556
          %v568 = vadd.f32 %v567, %v558
          %569 = vadd.xlane.f32.xlu0 %v568
          %v570 = vpop.xlane.xlu0 %569
          %v571 = vadd.f32 %v514, %v562
          %v572 = vadd.f32 %v515, %v566
          %v573 = vadd.f32 %v516, %v570
          %vm574 = vcmask 7168
          %575 = vst.msk [vmem:[#allocation3] sm:$0xff] %vm574, %v571
          %576 = vst.msk [vmem:[#allocation3 + $0x8] sm:$0xff] %vm574, %v572
          %577 = vst.msk [vmem:[#allocation3 + $0x10] sm:$0xff] %vm574, %v573
          %578 = vst.msk [vmem:[#allocation2] sm:$0xff] %vm574, %v499
          %579 = vst.msk [vmem:[#allocation2 + $0x8] sm:$0xff] %vm574, %v500
          %580 = vst.msk [vmem:[#allocation2 + $0x10] sm:$0xff] %vm574, %v501
        $region48: #{tpu_custom_call.1} parent=31 // pred_fallthru
          _
        // Predicated region
        $region49: #{tpu_custom_call.1} parent=31 // pred_check
          _
        $region50: #{tpu_custom_call.1} parent=31 // pred_check_branch
          %582 = sbr.rel (%p244) target = $region52
        $region51: #{tpu_custom_call.1} parent=31 // pred_region
          %v583 = vld [vmem:[#allocation2] sm:$0xff]
          %v584 = vld [vmem:[#allocation2 + $0x8] sm:$0xff]
          %v585 = vld [vmem:[#allocation2 + $0x10] sm:$0xff]
          %v586 = vld [vmem:[#allocation3] sm:$0xff]
          %v587 = vld [vmem:[#allocation3 + $0x8] sm:$0xff]
          %v588 = vld [vmem:[#allocation3 + $0x10] sm:$0xff]
          %v589 = vlog2.pop %v586
          %v590 = vmul.f32 %v589, 0.6931472
          %v591 = vlog2.pop %v587
          %v592 = vmul.f32 %v591, 0.6931472
          %v593 = vlog2.pop %v588
          %v594 = vmul.f32 %v593, 0.6931472
          %v595 = vadd.f32 %v583, %v590
          %v596 = vadd.f32 %v584, %v592
          %v597 = vadd.f32 %v585, %v594
          %vm598 = vcmask 7168
          %599 = vst.msk [vmem:[#allocation4] sm:$0xff] %vm598, %v595
          %600 = vst.msk [vmem:[#allocation4 + $0x8] sm:$0xff] %vm598, %v596
          %601 = vst.msk [vmem:[#allocation4 + $0x10] sm:$0xff] %vm598, %v597
        $region52: #{tpu_custom_call.1} parent=31 // pred_fallthru
          _
        %p602 = scmp.eq.s32.totalorder %s25, 1
        // Predicated region
        $region53: #{tpu_custom_call.1} parent=31 // pred_check
          %p603 = pneg %p602
        $region54: #{tpu_custom_call.1} parent=31 // pred_check_branch
          %605 = sbr.rel (%p603) target = $region56
        $region55: #{tpu_custom_call.1} parent=31 // pred_region
          %v606 = vld [vmem:[#allocation4] sm:$0xff]
          %v607 = vld [vmem:[#allocation4 + $0x8] sm:$0xff]
          %v608 = vld [vmem:[#allocation4 + $0x10] sm:$0xff]
          %610 = vset.pattern.permute.xlu0 0
          %611 = vperm.xlu0 %610, %v606
          %v612 = vpop.permute.xlu0 %611
          %615 = vset.pattern.permute.xlu0 0
          %616 = vperm.xlu0 %615, %v607
          %v617 = vpop.permute.xlu0 %616
          %620 = vset.pattern.permute.xlu0 0
          %621 = vperm.xlu0 %620, %v608
          %v622 = vpop.permute.xlu0 %621
          %v624 = vsub.f32 %v472, %v612
          %v625 = vsub.f32 %v473, %v612
          %v626 = vsub.f32 %v474, %v612
          %v627 = vsub.f32 %v475, %v617
          %v628 = vsub.f32 %v476, %v617
          %v629 = vsub.f32 %v477, %v617
          %v630 = vsub.f32 %v478, %v622
          %v631 = vsub.f32 %v479, %v622
          %v632 = vsub.f32 %v480, %v622
          %633 = vst [vmem:[%s231] sm:$0xff] %v624
          %634 = vst [vmem:[%s231 + $0x8] sm:$0xff] %v625
          %635 = vst [vmem:[%s231 + $0x10] sm:$0xff] %v626
          %636 = vst [vmem:[%s231 + $0x18] sm:$0xff] %v627
          %637 = vst [vmem:[%s231 + $0x20] sm:$0xff] %v628
          %638 = vst [vmem:[%s231 + $0x28] sm:$0xff] %v629
          %639 = vst [vmem:[%s231 + $0x30] sm:$0xff] %v630
          %640 = vst [vmem:[%s231 + $0x38] sm:$0xff] %v631
          %641 = vst [vmem:[%s231 + $0x40] sm:$0xff] %v632
        $region56: #{tpu_custom_call.1} parent=31 // pred_fallthru
          _
        %s642 = sand.u32 %s128, 1
        %s643 = scalar_lea.sflag [#allocation7], %s642
        %s644 = sand.u32 %s128, 1
        %s645 = smul.addr %s644, 72
        %s646 = scalar_lea.vmem [#allocation10], %s645
        // Predicated region
        $region57: #{tpu_custom_call.1} parent=31 // pred_check
          %p647 = pneg %p138
        $region58: #{tpu_custom_call.1} parent=31 // pred_check_branch
          %649 = sbr.rel (%p647) target = $region60
        $region59: #{tpu_custom_call.1} parent=31 // pred_region
          %s650 = smul.u32 %s25, %s26
          %s651 = smul.u32 3, %s24
          %s652 = smul.u32 3, %s650
          %s654 = ssub.s32 1152, 1152
          %655 = vsyncadd %s643, %s654
          %s656 = smul.addr %s651, 3
          %s657 = sadd.s32 %s652, %s656
          %s658 = smul.addr %s657, 128
          %s659 = scalar_lea.hbm %s3, %s658
          %s660 = sshll.u32 %s646, 4
          %s661 = int_to_ptr.vmem [resolvable:$true] %s660
          %666 = dma.vmem_to_hbm [thread:$0]  %s661, 1152, %s659, %s643, 384, 384, 24
        $region60: #{tpu_custom_call.1} parent=31 // pred_fallthru
          _
      $region32: #{tpu_custom_call.1} parent=5 // pred_fallthru
        _
      %p667 = scmp.le.s32.totalorder 2, %s14
      // Predicated region
      $region61: #{tpu_custom_call.1} parent=5 // pred_check
        %p668 = pneg %p667
      $region62: #{tpu_custom_call.1} parent=5 // pred_check_branch
        %670 = sbr.rel (%p668) target = $region64
      $region63: #{tpu_custom_call.1} parent=5 // pred_region
        %s671 = ssub.s32 %s14, 2
        // Predicated region
        $region65: #{tpu_custom_call.1} parent=63 // pred_check
          %p672 = pneg %p144
        $region66: #{tpu_custom_call.1} parent=63 // pred_check_branch
          %674 = sbr.rel (%p672) target = $region68
        $region67: #{tpu_custom_call.1} parent=63 // pred_region
          %s675 = sand.u32 %s129, 1
          %s676 = scalar_lea.sflag [#allocation7], %s675
          %s677 = sand.u32 %s129, 1
          %s678 = smul.addr %s677, 72
          %s679 = scalar_lea.vmem [#allocation10], %s678
          %680 = dma.done %s676, 1152
        $region68: #{tpu_custom_call.1} parent=63 // pred_fallthru
          _
      $region64: #{tpu_custom_call.1} parent=5 // pred_fallthru
        _
    $region6: #{tpu_custom_call.1} parent=1 // loop_footer
      %s18 = sadd.s32 1, %s14
    $region7: #{tpu_custom_call.1} parent=1 // loop_footer_branch
      %13 = sbr.rel target = $region3
    $region8: #{tpu_custom_call.1} parent=1 // loop_exit
      _
    %681 = vsyncpa [#allocation6], 1
    %s682 = scalar_lea.sflag [#allocation6], 1
    %683 = vsyncpa %s682, 1
    %684 = vsyncpa [#allocation9], 1
    %685 = vsyncpa [#allocation7], 1
    %s686 = scalar_lea.sflag [#allocation7], 1
    %687 = vsyncpa %s686, 1

</llo_original>
